<compile_context>
chip_gen: v6e
topology: v6e:2x2x1
jax: 0.10.0
libtpu: 0.0.40
codegen_flags: <defaults>
</compile_context>

<pallas_src>
import functools
import itertools
import math

import numpy as np
import jax
import jax.numpy as jnp
from jax.experimental import pallas as pl
from jax.experimental.pallas import tpu as pltpu

EPS_BN = 1e-3        # BatchNorm eps used throughout the torch model
EPS_ATTN = 1e-4      # BiFPN fast-attention eps


# --------------------------------------------------------------------------
# Fused depthwise-3x3 + pointwise core (runs inside the Pallas kernels)
# --------------------------------------------------------------------------
def _dw_pw_core(xpad, dw, pw, bias):
    """xpad: (Hc+2, Wc+2, C) f32 with a zero halo; dw: (3,3,C) f32; pw: (C,N) bf16;
    bias: (1,N) f32.  Returns (Hc*Wc, N) f32.  Wc is a multiple of 8 by construction,
    so the flatten below is a pure (tile-aligned) shape cast."""
    Hp, Wp, C = xpad.shape
    Hc, Wc = Hp - 2, Wp - 2
    rows = [xpad[dh:dh + Hc, :, :] for dh in range(3)]          # outer-dim slices (cheap)
    acc = None
    for di in range(3):
        col = (rows[0] * dw[0:1, di:di + 1, :] +
               rows[1] * dw[1:2, di:di + 1, :] +
               rows[2] * dw[2:3, di:di + 1, :])                 # (Hc, Wc+2, C)
        term = col[:, di:di + Wc, :]                            # 3 sublane-offset slices total
        acc = term if acc is None else acc + term
    y = acc.reshape(Hc * Wc, C).astype(jnp.bfloat16)
    z = jnp.dot(y, pw, preferred_element_type=jnp.float32)      # MXU, f32 accumulation
    return z + bias


# --------------------------------------------------------------------------
# Kernel 1: BiFPN node = fast-attention fusion + swish + separable conv (+ folded BN)
# --------------------------------------------------------------------------
def _bifpn_node_kernel(*args, n_in, act):
    x_refs = args[:n_in]
    fw_ref, dw_ref, pw_ref, b_ref, o_ref = args[n_in:]
    _, Hp, Wp, C = x_refs[0].shape
    x = fw_ref[0] * x_refs[0][...].reshape(Hp, Wp, C)
    for i in range(1, n_in):
        x = x + fw_ref[i] * x_refs[i][...].reshape(Hp, Wp, C)
    x = x * jax.nn.sigmoid(x)                                    # swish; zero halo stays zero
    z = _dw_pw_core(x, dw_ref[...], pw_ref[...], b_ref[...])
    if act == "swish":
        z = z * jax.nn.sigmoid(z)
    elif act == "sigmoid":
        z = jax.nn.sigmoid(z)
    o_ref[...] = z.reshape(o_ref.shape).astype(o_ref.dtype)


@functools.lru_cache(maxsize=None)
def _bifpn_node_fn(n_in, B, Hc, Wc, C, N, act):
    Hp, Wp = Hc + 2, Wc + 2
    kern = functools.partial(_bifpn_node_kernel, n_in=n_in, act=act)
    x_spec = pl.BlockSpec((1, Hp, Wp, C), lambda b: (b, 0, 0, 0))
    in_specs = ([x_spec] * n_in + [
        pl.BlockSpec(memory_space=pltpu.MemorySpace.SMEM),       # fusion weights (runtime)
        pl.BlockSpec((3, 3, C), lambda b: (0, 0, 0)),            # depthwise weights
        pl.BlockSpec((C, N), lambda b: (0, 0)),                  # pointwise weights (bf16)
        pl.BlockSpec((1, N), lambda b: (0, 0)),                  # bias (+folded BN)
    ])
    return jax.jit(pl.pallas_call(
        kern,
        out_shape=jax.ShapeDtypeStruct((B, Hc * Wc, N), jnp.float32),
        grid=(B,),
        in_specs=in_specs,
        out_specs=pl.BlockSpec((1, Hc * Wc, N), lambda b: (b, 0, 0)),
        compiler_params=pltpu.CompilerParams(dimension_semantics=("parallel",)),
    ))


def fused_weighted_sepconv(conv_p, inputs, fuse_w):
    """swish(sum_i w_i * x_i) -> depthwise 3x3 -> pointwise (+folded BN), one Pallas call."""
    B, H, W, C = inputs[0].shape
    Hc, Wc = H, max(W, 8)                      # sublane-friendly compute canvas
    N = conv_p["pw"].shape[1]
    padded = [jnp.pad(t, ((0, 0), (1, Hc + 1 - H), (1, Wc + 1 - W), (0, 0)))
              for t in inputs]
    out = _bifpn_node_fn(len(inputs), B, Hc, Wc, C, N, "none")(
        *padded, fuse_w, conv_p["dw"], conv_p["pw"], conv_p["b"].reshape(1, N))
    out = out.reshape(B, Hc, Wc, N)
    if (Hc, Wc) != (H, W):
        out = out[:, :H, :W, :]
    return out


# --------------------------------------------------------------------------
# Kernel 2: head layer — 5 pyramid levels batched on a (level, batch) grid
# --------------------------------------------------------------------------
def _head_layer_kernel(canvas_ref, mask_ref, dw_ref, pw_ref, b_ref, s_ref, t_ref,
                       o_ref, *, act):
    _, _, Hp, Wp, C = canvas_ref.shape
    x = canvas_ref[...].reshape(Hp, Wp, C)
    z = _dw_pw_core(x, dw_ref[...], pw_ref[...], b_ref[...])
    N = z.shape[-1]
    z = z * s_ref[...].reshape(1, N) + t_ref[...].reshape(1, N)  # per-level folded BN
    if act == "swish":
        z = z * jax.nn.sigmoid(z)
    elif act == "sigmoid":
        z = jax.nn.sigmoid(z)
    z = z * mask_ref[...].reshape(-1, 1)                         # zero spill outside level
    o_ref[...] = z.reshape(o_ref.shape).astype(o_ref.dtype)


@functools.lru_cache(maxsize=None)
def _head_layer_fn(L, B, Hc, Wc, C, N, act):
    Hp, Wp = Hc + 2, Wc + 2
    kern = functools.partial(_head_layer_kernel, act=act)
    return jax.jit(pl.pallas_call(
        kern,
        out_shape=jax.ShapeDtypeStruct((L, B, Hc * Wc, N), jnp.float32),
        grid=(L, B),
        in_specs=[
            pl.BlockSpec((1, 1, Hp, Wp, C), lambda l, b: (l, b, 0, 0, 0)),  # canvas
            pl.BlockSpec((1, Hc * Wc, 1), lambda l, b: (l, 0, 0)),          # level mask
            pl.BlockSpec((3, 3, C), lambda l, b: (0, 0, 0)),                # depthwise
            pl.BlockSpec((C, N), lambda l, b: (0, 0)),                      # pointwise (bf16)
            pl.BlockSpec((1, N), lambda l, b: (0, 0)),                      # conv bias
            pl.BlockSpec((1, 1, N), lambda l, b: (l, 0, 0)),                # BN scale (per level)
            pl.BlockSpec((1, 1, N), lambda l, b: (l, 0, 0)),                # BN shift (per level)
        ],
        out_specs=pl.BlockSpec((1, 1, Hc * Wc, N), lambda l, b: (l, b, 0, 0)),
        compiler_params=pltpu.CompilerParams(
            dimension_semantics=("parallel", "parallel")),
    ))


# --------------------------------------------------------------------------
# Kernel 3: pointwise (1x1) conv as a tiled MXU matmul (+ bias + activation)
# --------------------------------------------------------------------------
def _matmul_bias_act_kernel(x_ref, w_ref, b_ref, o_ref, *, act):
    y = jnp.dot(x_ref[...].astype(jnp.bfloat16), w_ref[...],
                preferred_element_type=jnp.float32) + b_ref[...]
    if act == "swish":
        y = y * jax.nn.sigmoid(y)
    elif act == "sigmoid":
        y = jax.nn.sigmoid(y)
    o_ref[...] = y.astype(o_ref.dtype)


@functools.lru_cache(maxsize=None)
def _pointwise_fn(M, K, N, act):
    tm = M if M <= 512 else 256          # small problems: single block; big: 256-row tiles
    kern = functools.partial(_matmul_bias_act_kernel, act=act)
    return jax.jit(pl.pallas_call(
        kern,
        out_shape=jax.ShapeDtypeStruct((M, N), jnp.float32),
        grid=(pl.cdiv(M, tm),),
        in_specs=[pl.BlockSpec((tm, K), lambda i: (i, 0)),
                  pl.BlockSpec((K, N), lambda i: (0, 0)),
                  pl.BlockSpec((1, N), lambda i: (0, 0))],
        out_specs=pl.BlockSpec((tm, N), lambda i: (i, 0)),
        compiler_params=pltpu.CompilerParams(dimension_semantics=("parallel",)),
    ))


def pointwise_conv(x_nhwc, w_kn, b_n, act="none"):
    B, H, W, K = x_nhwc.shape
    N = w_kn.shape[1]
    y = _pointwise_fn(B * H * W, K, N, act)(
        x_nhwc.reshape(B * H * W, K), w_kn, b_n.reshape(1, N))
    return y.reshape(B, H, W, N)


# --------------------------------------------------------------------------
# Plain-JAX glue: resampling, anchors, parameter init
# --------------------------------------------------------------------------
# TODO(synk): nearest-2x upsample / same-pad maxpool are kept as XLA glue ops instead of
# being folded into the consuming sepconv kernel's index_map; tensors here are tiny.
def max_pool_same_3x3_s2(x):
    B, H, W, C = x.shape
    extra_v = (math.ceil(H / 2) - 1) * 2 - H + 3
    extra_h = (math.ceil(W / 2) - 1) * 2 - W + 3
    top, left = extra_v // 2, extra_h // 2
    bottom, right = extra_v - top, extra_h - left
    xp = jnp.pad(x, ((0, 0), (top, bottom), (left, right), (0, 0)))
    return jax.lax.reduce_window(xp, -jnp.inf, jax.lax.max,
                                 (1, 3, 3, 1), (1, 2, 2, 1), "VALID")


def upsample_nearest_2x(x):
    return jnp.repeat(jnp.repeat(x, 2, axis=1), 2, axis=2)


def compute_anchors(image_hw, anchor_scale, pyramid_levels):
    """Anchors.forward — identical numpy math to the torch module (host-side glue)."""
    strides = [2 ** lv for lv in pyramid_levels]
    scales = np.array([2 ** 0, 2 ** (1.0 / 3.0), 2 ** (2.0 / 3.0)])
    ratios = [(1.0, 1.0), (1.4, 0.7), (0.7, 1.4)]
    boxes_all = []
    for stride in strides:
        assert image_hw[1] % stride == 0, "input size must be divisible by the stride."
        boxes_level = []
        for scale, ratio in itertools.product(scales, ratios):
            base = anchor_scale * stride * scale
            ax2 = base * ratio[0] / 2.0
            ay2 = base * ratio[1] / 2.0
            x = np.arange(stride / 2, image_hw[1], stride)
            y = np.arange(stride / 2, image_hw[0], stride)
            xv, yv = np.meshgrid(x, y)
            xv, yv = xv.reshape(-1), yv.reshape(-1)
            boxes = np.vstack((yv - ay2, xv - ax2, yv + ay2, xv + ax2))
            boxes = np.swapaxes(boxes, 0, 1)
            boxes_level.append(np.expand_dims(boxes, axis=1))
        boxes_level = np.concatenate(boxes_level, axis=1)
        boxes_all.append(boxes_level.reshape([-1, 4]))
    anchor_boxes = np.vstack(boxes_all).astype(np.float32)
    return jnp.asarray(anchor_boxes)[None]  # (1, total_anchors, 4)


class ParamGen:
    """Deterministic parameter initializer (stand-in for torch default init)."""

    def __init__(self, seed=0):
        self.key = jax.random.PRNGKey(seed)

    def next(self, shape, scale=0.05):
        self.key, sub = jax.random.split(self.key)
        return scale * jax.random.normal(sub, shape, jnp.float32)


def _fold_default_bn(w, b):
    # Eval-mode (freeze_bn) BatchNorm with default init: mean=0, var=1, gamma=1, beta=0.
    s = 1.0 / math.sqrt(1.0 + EPS_BN)
    return w * s, b * s


def make_sepconv(pg, cin, cout, with_bn):
    """SeparableConvBlock: depthwise 3x3 (no bias) + pointwise 1x1 (+BN folded)."""
    dw = pg.next((3, 3, cin))
    pw = pg.next((cin, cout))
    b = pg.next((cout,), scale=0.01)
    if with_bn:
        pw, b = _fold_default_bn(pw, b)
    return {"dw": dw, "pw": pw.astype(jnp.bfloat16), "b": b}


def make_conv1x1_bn(pg, cin, cout):
    w = pg.next((cin, cout))
    b = pg.next((cout,), scale=0.01)
    w, b = _fold_default_bn(w, b)
    return {"w": w.astype(jnp.bfloat16), "b": b}


def _norm_attn(w_raw):
    w = jnp.maximum(w_raw, 0.0)
    return w / (jnp.sum(w) + EPS_ATTN)


# --------------------------------------------------------------------------
# Backbone (simplified EfficientNet feature extractor)
# --------------------------------------------------------------------------
def make_backbone_params(pg, conv_channels):
    # TODO(synk): full EfficientNet-B0 MBConv stack not reproduced; a stride-8
    # patch-embedding + pointwise projections stand in, producing p3/p4/p5 at
    # strides 8/16/32 with the channel counts the BiFPN expects ([40,112,320]).
    return {
        "p3": {"w": pg.next((3 * 8 * 8, conv_channels[0])).astype(jnp.bfloat16),
               "b": pg.next((conv_channels[0],), 0.01)},
        "p4": {"w": pg.next((conv_channels[0], conv_channels[1])).astype(jnp.bfloat16),
               "b": pg.next((conv_channels[1],), 0.01)},
        "p5": {"w": pg.next((conv_channels[1], conv_channels[2])).astype(jnp.bfloat16),
               "b": pg.next((conv_channels[2],), 0.01)},
    }


def backbone_forward(p, x_nhwc):
    B, H, W, C = x_nhwc.shape
    s = 8  # stride-8 "conv" with kernel=8 implemented as space-to-depth + matmul
    x = x_nhwc.reshape(B, H // s, s, W // s, s, C)
    x = x.transpose(0, 1, 3, 2, 4, 5).reshape(B, H // s, W // s, s * s * C)
    p3 = pointwise_conv(x, p["p3"]["w"], p["p3"]["b"], act="swish")
    p4 = pointwise_conv(max_pool_same_3x3_s2(p3), p["p4"]["w"], p["p4"]["b"], act="swish")
    p5 = pointwise_conv(max_pool_same_3x3_s2(p4), p["p5"]["w"], p["p5"]["b"], act="swish")
    return p3, p4, p5


# --------------------------------------------------------------------------
# BiFPN (fast-attention path, attention=True for compound_coef < 6)
# --------------------------------------------------------------------------
def make_bifpn_params(pg, num_channels, conv_channels, first_time):
    p = {"first_time": first_time}
    for n in ("conv6_up", "conv5_up", "conv4_up", "conv3_up",
              "conv4_down", "conv5_down", "conv6_down", "conv7_down"):
        p[n] = make_sepconv(pg, num_channels, num_channels, with_bn=True)
    if first_time:
        p["p5_down_channel"] = make_conv1x1_bn(pg, conv_channels[2], num_channels)
        p["p4_down_channel"] = make_conv1x1_bn(pg, conv_channels[1], num_channels)
        p["p3_down_channel"] = make_conv1x1_bn(pg, conv_channels[0], num_channels)
        p["p5_to_p6"] = make_conv1x1_bn(pg, conv_channels[2], num_channels)
        p["p4_down_channel_2"] = make_conv1x1_bn(pg, conv_channels[1], num_channels)
        p["p5_down_channel_2"] = make_conv1x1_bn(pg, conv_channels[2], num_channels)
    # Fast-attention weights: raw params (init to ones), relu+normalize in forward,
    # delivered to the kernel via SMEM scalars at runtime (no recompile per value).
    p["w2"] = jnp.ones((2,), jnp.float32)
    p["w3"] = jnp.ones((3,), jnp.float32)
    return p


def bifpn_forward(p, feats):
    if p["first_time"]:
        p3, p4, p5 = feats
        p6_in = max_pool_same_3x3_s2(
            pointwise_conv(p5, p["p5_to_p6"]["w"], p["p5_to_p6"]["b"]))
        p7_in = max_pool_same_3x3_s2(p6_in)
        p3_in = pointwise_conv(p3, p["p3_down_channel"]["w"], p["p3_down_channel"]["b"])
        p4_in = pointwise_conv(p4, p["p4_down_channel"]["w"], p["p4_down_channel"]["b"])
        p5_in = pointwise_conv(p5, p["p5_down_channel"]["w"], p["p5_down_channel"]["b"])
    else:
        p3_in, p4_in, p5_in, p6_in, p7_in = feats

    w2 = _norm_attn(p["w2"])
    w3 = _norm_attn(p["w3"])

    # top-down pathway (each node: fusion + swish + sepconv fused in one kernel)
    p6_up = fused_weighted_sepconv(p["conv6_up"], [p6_in, upsample_nearest_2x(p7_in)], w2)
    p5_up = fused_weighted_sepconv(p["conv5_up"], [p5_in, upsample_nearest_2x(p6_up)], w2)
    p4_up = fused_weighted_sepconv(p["conv4_up"], [p4_in, upsample_nearest_2x(p5_up)], w2)
    p3_out = fused_weighted_sepconv(p["conv3_up"], [p3_in, upsample_nearest_2x(p4_up)], w2)

    if p["first_time"]:
        p4_in = pointwise_conv(feats[1], p["p4_down_channel_2"]["w"], p["p4_down_channel_2"]["b"])
        p5_in = pointwise_conv(feats[2], p["p5_down_channel_2"]["w"], p["p5_down_channel_2"]["b"])

    # bottom-up pathway
    p4_out = fused_weighted_sepconv(
        p["conv4_down"], [p4_in, p4_up, max_pool_same_3x3_s2(p3_out)], w3)
    p5_out = fused_weighted_sepconv(
        p["conv5_down"], [p5_in, p5_up, max_pool_same_3x3_s2(p4_out)], w3)
    p6_out = fused_weighted_sepconv(
        p["conv6_down"], [p6_in, p6_up, max_pool_same_3x3_s2(p5_out)], w3)
    p7_out = fused_weighted_sepconv(
        p["conv7_down"], [p7_in, max_pool_same_3x3_s2(p6_out)], w2)
    return p3_out, p4_out, p5_out, p6_out, p7_out


# --------------------------------------------------------------------------
# Regressor / Classifier heads (5 pyramid levels batched per layer)
# --------------------------------------------------------------------------
def make_head_params(pg, in_ch, num_layers, num_levels, out_ch):
    convs = [make_sepconv(pg, in_ch, in_ch, with_bn=False) for _ in range(num_layers)]
    bns = [[{"gamma": jnp.ones((in_ch,), jnp.float32),
             "beta": jnp.zeros((in_ch,), jnp.float32),
             "mean": jnp.zeros((in_ch,), jnp.float32),
             "var": jnp.ones((in_ch,), jnp.float32)}
            for _ in range(num_layers)] for _ in range(num_levels)]
    header = make_sepconv(pg, in_ch, out_ch, with_bn=False)
    return {"convs": convs, "bns": bns, "header": header}


def head_forward(params, feats, out_per_anchor, num_anchors, final_act="none"):
    L = len(feats)
    B, Hmax, Wmax, C = feats[0].shape
    Hc, Wc = Hmax, max(Wmax, 8)
    sizes = [(f.shape[1], f.shape[2]) for f in feats]

    # Stack all levels into a zero-padded canvas (L, B, Hc+2, Wc+2, C).
    canvas = jnp.stack(
        [jnp.pad(f, ((0, 0), (1, Hc + 1 - h), (1, Wc + 1 - w), (0, 0)))
         for f, (h, w) in zip(feats, sizes)], axis=0)

    # Per-level validity mask (constant under jit).
    mask_np = np.zeros((L, Hc, Wc, 1), np.float32)
    for l, (h, w) in enumerate(sizes):
        mask_np[l, :h, :w, :] = 1.0
    mask = jnp.asarray(mask_np.reshape(L, Hc * Wc, 1))

    for i, conv in enumerate(params["convs"]):
        gs = jnp.stack([params["bns"][l][i]["gamma"] for l in range(L)], 0)
        vs = jnp.stack([params["bns"][l][i]["var"] for l in range(L)], 0)
        ms = jnp.stack([params["bns"][l][i]["mean"] for l in range(L)], 0)
        bs = jnp.stack([params["bns"][l][i]["beta"] for l in range(L)], 0)
        scale = (gs / jnp.sqrt(vs + EPS_BN)).reshape(L, 1, C)
        shift = (bs - ms * gs / jnp.sqrt(vs + EPS_BN)).reshape(L, 1, C)
        out_flat = _head_layer_fn(L, B, Hc, Wc, C, C, "swish")(
            canvas, mask, conv["dw"], conv["pw"], conv["b"].reshape(1, C), scale, shift)
        canvas = jnp.pad(out_flat.reshape(L, B, Hc, Wc, C),
                         ((0, 0), (0, 0), (1, 1), (1, 1), (0, 0)))

    h = params["header"]
    N = h["pw"].shape[1]
    ident_s = jnp.ones((L, 1, N), jnp.float32)
    ident_t = jnp.zeros((L, 1, N), jnp.float32)
    out_flat = _head_layer_fn(L, B, Hc, Wc, C, N, final_act)(
        canvas, mask, h["dw"], h["pw"], h["b"].reshape(1, N), ident_s, ident_t)
    out = out_flat.reshape(L, B, Hc, Wc, N)

    outs = []
    for l, (hl, wl) in enumerate(sizes):
        o = out[l, :, :hl, :wl, :]
        outs.append(o.reshape(B, hl * wl * num_anchors, out_per_anchor))
    return jnp.concatenate(outs, axis=1)


# --------------------------------------------------------------------------
# Full model
# --------------------------------------------------------------------------
class EfficientDetBackbonePallas:
    def __init__(self, num_classes=80, compound_coef=0, seed=0):
        assert compound_coef == 0, "this synthetic kernel instantiates D0"
        self.compound_coef = compound_coef
        self.fpn_num_filters = 64
        self.fpn_cell_repeats = 3
        self.box_class_repeats = 3
        self.pyramid_levels = 5
        self.anchor_scale = 4.0
        self.conv_channels = [40, 112, 320]
        self.num_classes = num_classes
        self.num_anchors = 3 * 3  # len(ratios) * num_scales

        pg = ParamGen(seed)
        self.backbone = make_backbone_params(pg, self.conv_channels)
        self.bifpn = [make_bifpn_params(pg, self.fpn_num_filters, self.conv_channels,
                                        first_time=(i == 0))
                      for i in range(self.fpn_cell_repeats)]
        self.regressor = make_head_params(pg, self.fpn_num_filters, self.box_class_repeats,
                                          self.pyramid_levels, self.num_anchors * 4)
        self.classifier = make_head_params(pg, self.fpn_num_filters, self.box_class_repeats,
                                           self.pyramid_levels, self.num_anchors * num_classes)
        self._jit_forward = jax.jit(self._forward)

    def _forward(self, inputs_nchw):
        x = jnp.transpose(inputs_nchw.astype(jnp.float32), (0, 2, 3, 1))  # NCHW -> NHWC
        p3, p4, p5 = backbone_forward(self.backbone, x)
        feats = (p3, p4, p5)
        for bp in self.bifpn:
            feats = bifpn_forward(bp, feats)
        regression = head_forward(self.regressor, feats, 4, self.num_anchors, "none")
        classification = head_forward(self.classifier, feats, self.num_classes,
                                      self.num_anchors, "sigmoid")
        return feats, regression, classification

    def __call__(self, inputs_nchw):
        feats, regression, classification = self._jit_forward(inputs_nchw)
        anchors = compute_anchors(inputs_nchw.shape[2:], self.anchor_scale,
                                  tuple(range(3, 3 + self.pyramid_levels)))
        return feats, regression, classification, anchors


if __name__ == "__main__":
    key = jax.random.PRNGKey(0)
    # Small input (must be divisible by 2^7 = 128 for the 5-level pyramid).
    inputs = jax.random.normal(key, (2, 3, 128, 128), jnp.float32)  # NCHW like torch

    model = EfficientDetBackbonePallas(num_classes=80, compound_coef=0, seed=0)
    features, regression, classification, anchors = model(inputs)

    jax.block_until_ready((features, regression, classification, anchors))

    # sanity checks on output shapes (341 = 16^2 + 8^2 + 4^2 + 2^2 + 1^2 cells)
    assert regression.shape == (2, 341 * 9, 4)
    assert classification.shape == (2, 341 * 9, 80)
    assert anchors.shape == (1, 341 * 9, 4)
    assert len(features) == 5 and features[0].shape == (2, 16, 16, 64)
    assert all(bool(jnp.all(jnp.isfinite(f))) for f in features)

    print("KERNEL_OK")
</pallas_src>

<mosaic_0001>
module attributes {stable_mosaic.version = 11 : i64} {
  func.func @_matmul_bias_act_kernel(%arg0: i32, %arg1: memref<512x192xf32, #tpu.memory_space<vmem>>, %arg2: memref<192x40xbf16, #tpu.memory_space<vmem>>, %arg3: memref<1x40xf32, #tpu.memory_space<vmem>>, %arg4: memref<512x40xf32, #tpu.memory_space<vmem>>) attributes {dimension_semantics = [#tpu.dimension_semantics<parallel>], iteration_bounds = array<i64: 1>, scalar_prefetch = 0 : i64, scratch_operands = 0 : i64, tpu.core_type = #tpu.core_type<tc>, window_params = [{transform_indices = @transform_0, window_bounds = array<i64: 512, 192>}, {pipeline_mode = #tpu.pipeline_mode<synchronous>, transform_indices = @transform_1, window_bounds = array<i64: 192, 40>}, {pipeline_mode = #tpu.pipeline_mode<synchronous>, transform_indices = @transform_2, window_bounds = array<i64: 1, 40>}, {transform_indices = @transform_3, window_bounds = array<i64: 512, 40>}]} {
    %c0 = arith.constant 0 : index
    %c0_0 = arith.constant 0 : index
    %0 = vector.load %arg1[%c0, %c0_0] : memref<512x192xf32, #tpu.memory_space<vmem>>, vector<512x192xf32>
    %1 = arith.truncf %0 : vector<512x192xf32> to vector<512x192xbf16>
    %c0_1 = arith.constant 0 : index
    %c0_2 = arith.constant 0 : index
    %2 = vector.load %arg2[%c0_1, %c0_2] : memref<192x40xbf16, #tpu.memory_space<vmem>>, vector<192x40xbf16>
    %cst = arith.constant dense<0.000000e+00> : vector<512x40xf32>
    %3 = tpu.matmul %1, %2, %cst {dimension_numbers = #tpu.dot_dimension_numbers<[1], [0], [0], [1], [0, 0, 1, 1], [], []>} : vector<512x192xbf16>, vector<192x40xbf16>, vector<512x40xf32> -> vector<512x40xf32>
    %c0_3 = arith.constant 0 : index
    %c0_4 = arith.constant 0 : index
    %4 = vector.load %arg3[%c0_3, %c0_4] : memref<1x40xf32, #tpu.memory_space<vmem>>, vector<1x40xf32>
    %5 = vector.broadcast %4 : vector<1x40xf32> to vector<512x40xf32>
    %6 = arith.addf %3, %5 : vector<512x40xf32>
    %7 = arith.negf %6 : vector<512x40xf32>
    %8 = math.exp %7 : vector<512x40xf32>
    %cst_5 = arith.constant 1.000000e+00 : f32
    %9 = vector.broadcast %cst_5 : f32 to vector<512x40xf32>
    %10 = arith.addf %9, %8 : vector<512x40xf32>
    %11 = arith.divf %9, %10 : vector<512x40xf32>
    %12 = arith.mulf %6, %11 : vector<512x40xf32>
    %c0_6 = arith.constant 0 : index
    %c0_7 = arith.constant 0 : index
    %13 = vector.load %arg4[%c0_6, %c0_7] : memref<512x40xf32, #tpu.memory_space<vmem>>, vector<512x40xf32>
    tpu.vector_store %arg4[%c0_6, %c0_7], %12 {strides = array<i32>} : memref<512x40xf32, #tpu.memory_space<vmem>>, vector<512x40xf32>,
    return
  }
  func.func @transform_0(%arg0: i32) -> (i32, i32) {
    %c0_i32 = arith.constant 0 : i32
    %c0_i32_0 = arith.constant 0 : i32
    return %arg0, %c0_i32 : i32, i32
  }
  func.func @transform_1(%arg0: i32) -> (i32, i32) {
    %c0_i32 = arith.constant 0 : i32
    %c0_i32_0 = arith.constant 0 : i32
    %c0_i32_1 = arith.constant 0 : i32
    return %c0_i32, %c0_i32_0 : i32, i32
  }
  func.func @transform_2(%arg0: i32) -> (i32, i32) {
    %c0_i32 = arith.constant 0 : i32
    %c0_i32_0 = arith.constant 0 : i32
    %c0_i32_1 = arith.constant 0 : i32
    return %c0_i32, %c0_i32_0 : i32, i32
  }
  func.func @transform_3(%arg0: i32) -> (i32, i32) {
    %c0_i32 = arith.constant 0 : i32
    %c0_i32_0 = arith.constant 0 : i32
    return %arg0, %c0_i32 : i32, i32
  }
}

</mosaic_0001>

<llo_original>
// kernel: tpu_custom_call.1
$region0: #{tpu_custom_call.1}
  #allocation0 [shape = 'u32[]', space=smem, size = 0x4, offset = 0x4, fixed_abs, tag = 'smem constant byte address 0x4 - core index']
  #allocation1 [shape = 'u32[144,128]{1,0:T(1,128)}', space=vmem, size = 0x12000, scoped, tag = 'internal scratch']
  %s0 = inlined_call_operand.vmem [shape: f32[512,192], index: 0, kind: input, shape index: {}]
  %s1 = inlined_call_operand.vmem [shape: bf16[192,40], index: 1, kind: input, shape index: {}]
  %s2 = inlined_call_operand.vmem [shape: f32[1,40], index: 2, kind: input, shape index: {}]
  %s3 = inlined_call_operand.vmem [shape: f32[512,40], index: 3, kind: output, shape index: {}]
  %s4 = sld [smem:[#allocation0]]
  $region22: #{tpu_custom_call.1} parent=0
    _
  %s6 = ssub.s32 1, %s4
  %s7 = scalar_select 0, %s6, %s4
  // Predicated region
  $region2: #{tpu_custom_call.1} parent=0 // pred_check
    _
  $region3: #{tpu_custom_call.1} parent=0 // pred_check_branch
    %9 = sbr.rel (0) target = $region5
  $region4: #{tpu_custom_call.1} parent=0 // pred_region
    _
  $region5: #{tpu_custom_call.1} parent=0 // pred_fallthru
    _
  // Predicated region
  $region6: #{tpu_custom_call.1} parent=0 // pred_check
    _
  $region7: #{tpu_custom_call.1} parent=0 // pred_check_branch
    %11 = sbr.rel (0) target = $region9
  $region8: #{tpu_custom_call.1} parent=0 // pred_region
    _
  $region9: #{tpu_custom_call.1} parent=0 // pred_fallthru
    _
  // Predicated region
  $region10: #{tpu_custom_call.1} parent=0 // pred_check
    _
  $region11: #{tpu_custom_call.1} parent=0 // pred_check_branch
    %13 = sbr.rel (0) target = $region13
  $region12: #{tpu_custom_call.1} parent=0 // pred_region
    _
  $region13: #{tpu_custom_call.1} parent=0 // pred_fallthru
    _
  %v15 = vld [vmem:[%s0] sm:$0xff]
  %v16 = vld [vmem:[%s0 + $0x8] sm:$0xff]
  %v17 = vld [vmem:[%s0 + $0x10] sm:$0xff]
  %v18 = vld [vmem:[%s0 + $0x18] sm:$0xff]
  %v19 = vld [vmem:[%s0 + $0x20] sm:$0xff]
  %v20 = vld [vmem:[%s0 + $0x28] sm:$0xff]
  %v21 = vld [vmem:[%s0 + $0x30] sm:$0xff]
  %v22 = vld [vmem:[%s0 + $0x38] sm:$0xff]
  %v23 = vld [vmem:[%s0 + $0x40] sm:$0xff]
  %v24 = vld [vmem:[%s0 + $0x48] sm:$0xff]
  %v25 = vld [vmem:[%s0 + $0x50] sm:$0xff]
  %v26 = vld [vmem:[%s0 + $0x58] sm:$0xff]
  %v27 = vld [vmem:[%s0 + $0x60] sm:$0xff]
  %v28 = vld [vmem:[%s0 + $0x68] sm:$0xff]
  %v29 = vld [vmem:[%s0 + $0x70] sm:$0xff]
  %v30 = vld [vmem:[%s0 + $0x78] sm:$0xff]
  %v31 = vld [vmem:[%s0 + $0x80] sm:$0xff]
  %v32 = vld [vmem:[%s0 + $0x88] sm:$0xff]
  %v33 = vld [vmem:[%s0 + $0x90] sm:$0xff]
  %v34 = vld [vmem:[%s0 + $0x98] sm:$0xff]
  %v35 = vld [vmem:[%s0 + $0xa0] sm:$0xff]
  %v36 = vld [vmem:[%s0 + $0xa8] sm:$0xff]
  %v37 = vld [vmem:[%s0 + $0xb0] sm:$0xff]
  %v38 = vld [vmem:[%s0 + $0xb8] sm:$0xff]
  %v39 = vld [vmem:[%s0 + $0xc0] sm:$0xff]
  %v40 = vld [vmem:[%s0 + $0xc8] sm:$0xff]
  %v41 = vld [vmem:[%s0 + $0xd0] sm:$0xff]
  %v42 = vld [vmem:[%s0 + $0xd8] sm:$0xff]
  %v43 = vld [vmem:[%s0 + $0xe0] sm:$0xff]
  %v44 = vld [vmem:[%s0 + $0xe8] sm:$0xff]
  %v45 = vld [vmem:[%s0 + $0xf0] sm:$0xff]
  %v46 = vld [vmem:[%s0 + $0xf8] sm:$0xff]
  %v47 = vld [vmem:[%s0 + $0x100] sm:$0xff]
  %v48 = vld [vmem:[%s0 + $0x108] sm:$0xff]
  %v49 = vld [vmem:[%s0 + $0x110] sm:$0xff]
  %v50 = vld [vmem:[%s0 + $0x118] sm:$0xff]
  %v51 = vld [vmem:[%s0 + $0x120] sm:$0xff]
  %v52 = vld [vmem:[%s0 + $0x128] sm:$0xff]
  %v53 = vld [vmem:[%s0 + $0x130] sm:$0xff]
  %v54 = vld [vmem:[%s0 + $0x138] sm:$0xff]
  %v55 = vld [vmem:[%s0 + $0x140] sm:$0xff]
  %v56 = vld [vmem:[%s0 + $0x148] sm:$0xff]
  %v57 = vld [vmem:[%s0 + $0x150] sm:$0xff]
  %v58 = vld [vmem:[%s0 + $0x158] sm:$0xff]
  %v59 = vld [vmem:[%s0 + $0x160] sm:$0xff]
  %v60 = vld [vmem:[%s0 + $0x168] sm:$0xff]
  %v61 = vld [vmem:[%s0 + $0x170] sm:$0xff]
  %v62 = vld [vmem:[%s0 + $0x178] sm:$0xff]
  %v63 = vld [vmem:[%s0 + $0x180] sm:$0xff]
  %v64 = vld [vmem:[%s0 + $0x188] sm:$0xff]
  %v65 = vld [vmem:[%s0 + $0x190] sm:$0xff]
  %v66 = vld [vmem:[%s0 + $0x198] sm:$0xff]
  %v67 = vld [vmem:[%s0 + $0x1a0] sm:$0xff]
  %v68 = vld [vmem:[%s0 + $0x1a8] sm:$0xff]
  %v69 = vld [vmem:[%s0 + $0x1b0] sm:$0xff]
  %v70 = vld [vmem:[%s0 + $0x1b8] sm:$0xff]
  %v71 = vld [vmem:[%s0 + $0x1c0] sm:$0xff]
  %v72 = vld [vmem:[%s0 + $0x1c8] sm:$0xff]
  %v73 = vld [vmem:[%s0 + $0x1d0] sm:$0xff]
  %v74 = vld [vmem:[%s0 + $0x1d8] sm:$0xff]
  %v75 = vld [vmem:[%s0 + $0x1e0] sm:$0xff]
  %v76 = vld [vmem:[%s0 + $0x1e8] sm:$0xff]
  %v77 = vld [vmem:[%s0 + $0x1f0] sm:$0xff]
  %v78 = vld [vmem:[%s0 + $0x1f8] sm:$0xff]
  %v79 = vld [vmem:[%s0 + $0x200] sm:$0xff]
  %v80 = vld [vmem:[%s0 + $0x208] sm:$0xff]
  %v81 = vld [vmem:[%s0 + $0x210] sm:$0xff]
  %v82 = vld [vmem:[%s0 + $0x218] sm:$0xff]
  %v83 = vld [vmem:[%s0 + $0x220] sm:$0xff]
  %v84 = vld [vmem:[%s0 + $0x228] sm:$0xff]
  %v85 = vld [vmem:[%s0 + $0x230] sm:$0xff]
  %v86 = vld [vmem:[%s0 + $0x238] sm:$0xff]
  %v87 = vld [vmem:[%s0 + $0x240] sm:$0xff]
  %v88 = vld [vmem:[%s0 + $0x248] sm:$0xff]
  %v89 = vld [vmem:[%s0 + $0x250] sm:$0xff]
  %v90 = vld [vmem:[%s0 + $0x258] sm:$0xff]
  %v91 = vld [vmem:[%s0 + $0x260] sm:$0xff]
  %v92 = vld [vmem:[%s0 + $0x268] sm:$0xff]
  %v93 = vld [vmem:[%s0 + $0x270] sm:$0xff]
  %v94 = vld [vmem:[%s0 + $0x278] sm:$0xff]
  %v95 = vld [vmem:[%s0 + $0x280] sm:$0xff]
  %v96 = vld [vmem:[%s0 + $0x288] sm:$0xff]
  %v97 = vld [vmem:[%s0 + $0x290] sm:$0xff]
  %v98 = vld [vmem:[%s0 + $0x298] sm:$0xff]
  %v99 = vld [vmem:[%s0 + $0x2a0] sm:$0xff]
  %v100 = vld [vmem:[%s0 + $0x2a8] sm:$0xff]
  %v101 = vld [vmem:[%s0 + $0x2b0] sm:$0xff]
  %v102 = vld [vmem:[%s0 + $0x2b8] sm:$0xff]
  %v103 = vld [vmem:[%s0 + $0x2c0] sm:$0xff]
  %v104 = vld [vmem:[%s0 + $0x2c8] sm:$0xff]
  %v105 = vld [vmem:[%s0 + $0x2d0] sm:$0xff]
  %v106 = vld [vmem:[%s0 + $0x2d8] sm:$0xff]
  %v107 = vld [vmem:[%s0 + $0x2e0] sm:$0xff]
  %v108 = vld [vmem:[%s0 + $0x2e8] sm:$0xff]
  %v109 = vld [vmem:[%s0 + $0x2f0] sm:$0xff]
  %v110 = vld [vmem:[%s0 + $0x2f8] sm:$0xff]
  %v111 = vld [vmem:[%s0 + $0x300] sm:$0xff]
  %v112 = vld [vmem:[%s0 + $0x308] sm:$0xff]
  %v113 = vld [vmem:[%s0 + $0x310] sm:$0xff]
  %v114 = vld [vmem:[%s0 + $0x318] sm:$0xff]
  %v115 = vld [vmem:[%s0 + $0x320] sm:$0xff]
  %v116 = vld [vmem:[%s0 + $0x328] sm:$0xff]
  %v117 = vld [vmem:[%s0 + $0x330] sm:$0xff]
  %v118 = vld [vmem:[%s0 + $0x338] sm:$0xff]
  %v119 = vld [vmem:[%s0 + $0x340] sm:$0xff]
  %v120 = vld [vmem:[%s0 + $0x348] sm:$0xff]
  %v121 = vld [vmem:[%s0 + $0x350] sm:$0xff]
  %v122 = vld [vmem:[%s0 + $0x358] sm:$0xff]
  %v123 = vld [vmem:[%s0 + $0x360] sm:$0xff]
  %v124 = vld [vmem:[%s0 + $0x368] sm:$0xff]
  %v125 = vld [vmem:[%s0 + $0x370] sm:$0xff]
  %v126 = vld [vmem:[%s0 + $0x378] sm:$0xff]
  %v127 = vld [vmem:[%s0 + $0x380] sm:$0xff]
  %v128 = vld [vmem:[%s0 + $0x388] sm:$0xff]
  %v129 = vld [vmem:[%s0 + $0x390] sm:$0xff]
  %v130 = vld [vmem:[%s0 + $0x398] sm:$0xff]
  %v131 = vld [vmem:[%s0 + $0x3a0] sm:$0xff]
  %v132 = vld [vmem:[%s0 + $0x3a8] sm:$0xff]
  %v133 = vld [vmem:[%s0 + $0x3b0] sm:$0xff]
  %v134 = vld [vmem:[%s0 + $0x3b8] sm:$0xff]
  %v135 = vld [vmem:[%s0 + $0x3c0] sm:$0xff]
  %v136 = vld [vmem:[%s0 + $0x3c8] sm:$0xff]
  %v137 = vld [vmem:[%s0 + $0x3d0] sm:$0xff]
  %v138 = vld [vmem:[%s0 + $0x3d8] sm:$0xff]
  %v139 = vld [vmem:[%s0 + $0x3e0] sm:$0xff]
  %v140 = vld [vmem:[%s0 + $0x3e8] sm:$0xff]
  %v141 = vld [vmem:[%s0 + $0x3f0] sm:$0xff]
  %v142 = vld [vmem:[%s0 + $0x3f8] sm:$0xff]
  %v143 = vpack.c.bf16 %v17, %v15
  %v144 = vpack.c.bf16 %v18, %v16
  %v145 = vpack.c.bf16 %v21, %v19
  %v146 = vpack.c.bf16 %v22, %v20
  %v147 = vpack.c.bf16 %v25, %v23
  %v148 = vpack.c.bf16 %v26, %v24
  %v149 = vpack.c.bf16 %v29, %v27
  %v150 = vpack.c.bf16 %v30, %v28
  %v151 = vpack.c.bf16 %v33, %v31
  %v152 = vpack.c.bf16 %v34, %v32
  %v153 = vpack.c.bf16 %v37, %v35
  %v154 = vpack.c.bf16 %v38, %v36
  %v155 = vpack.c.bf16 %v41, %v39
  %v156 = vpack.c.bf16 %v42, %v40
  %v157 = vpack.c.bf16 %v45, %v43
  %v158 = vpack.c.bf16 %v46, %v44
  %v159 = vpack.c.bf16 %v49, %v47
  %v160 = vpack.c.bf16 %v50, %v48
  %v161 = vpack.c.bf16 %v53, %v51
  %v162 = vpack.c.bf16 %v54, %v52
  %v163 = vpack.c.bf16 %v57, %v55
  %v164 = vpack.c.bf16 %v58, %v56
  %v165 = vpack.c.bf16 %v61, %v59
  %v166 = vpack.c.bf16 %v62, %v60
  %v167 = vpack.c.bf16 %v65, %v63
  %v168 = vpack.c.bf16 %v66, %v64
  %v169 = vpack.c.bf16 %v69, %v67
  %v170 = vpack.c.bf16 %v70, %v68
  %v171 = vpack.c.bf16 %v73, %v71
  %v172 = vpack.c.bf16 %v74, %v72
  %v173 = vpack.c.bf16 %v77, %v75
  %v174 = vpack.c.bf16 %v78, %v76
  %v175 = vpack.c.bf16 %v81, %v79
  %v176 = vpack.c.bf16 %v82, %v80
  %v177 = vpack.c.bf16 %v85, %v83
  %v178 = vpack.c.bf16 %v86, %v84
  %v179 = vpack.c.bf16 %v89, %v87
  %v180 = vpack.c.bf16 %v90, %v88
  %v181 = vpack.c.bf16 %v93, %v91
  %v182 = vpack.c.bf16 %v94, %v92
  %v183 = vpack.c.bf16 %v97, %v95
  %v184 = vpack.c.bf16 %v98, %v96
  %v185 = vpack.c.bf16 %v101, %v99
  %v186 = vpack.c.bf16 %v102, %v100
  %v187 = vpack.c.bf16 %v105, %v103
  %v188 = vpack.c.bf16 %v106, %v104
  %v189 = vpack.c.bf16 %v109, %v107
  %v190 = vpack.c.bf16 %v110, %v108
  %v191 = vpack.c.bf16 %v113, %v111
  %v192 = vpack.c.bf16 %v114, %v112
  %v193 = vpack.c.bf16 %v117, %v115
  %v194 = vpack.c.bf16 %v118, %v116
  %v195 = vpack.c.bf16 %v121, %v119
  %v196 = vpack.c.bf16 %v122, %v120
  %v197 = vpack.c.bf16 %v125, %v123
  %v198 = vpack.c.bf16 %v126, %v124
  %v199 = vpack.c.bf16 %v129, %v127
  %v200 = vpack.c.bf16 %v130, %v128
  %v201 = vpack.c.bf16 %v133, %v131
  %v202 = vpack.c.bf16 %v134, %v132
  %v203 = vpack.c.bf16 %v137, %v135
  %v204 = vpack.c.bf16 %v138, %v136
  %v205 = vpack.c.bf16 %v141, %v139
  %v206 = vpack.c.bf16 %v142, %v140
  %v207 = vld [vmem:[%s1] sm:$0xf]
  %v208 = vld [vmem:[%s1 + $0x4] sm:$0xf]
  %v209 = vld [vmem:[%s1 + $0x8] sm:$0xf]
  %v210 = vld [vmem:[%s1 + $0xc] sm:$0xf]
  %v211 = vld [vmem:[%s1 + $0x10] sm:$0xf]
  %v212 = vld [vmem:[%s1 + $0x14] sm:$0xf]
  %v213 = vld [vmem:[%s1 + $0x18] sm:$0xf]
  %v214 = vld [vmem:[%s1 + $0x1c] sm:$0xf]
  %v215 = vld [vmem:[%s1 + $0x20] sm:$0xf]
  %v216 = vld [vmem:[%s1 + $0x24] sm:$0xf]
  %v217 = vld [vmem:[%s1 + $0x28] sm:$0xf]
  %v218 = vld [vmem:[%s1 + $0x2c] sm:$0xf]
  %v219 = vld [vmem:[%s1 + $0x30] sm:$0xf]
  %v220 = vld [vmem:[%s1 + $0x34] sm:$0xf]
  %v221 = vld [vmem:[%s1 + $0x38] sm:$0xf]
  %v222 = vld [vmem:[%s1 + $0x3c] sm:$0xf]
  %v223 = vld [vmem:[%s1 + $0x40] sm:$0xf]
  %v224 = vld [vmem:[%s1 + $0x44] sm:$0xf]
  %v225 = vld [vmem:[%s1 + $0x48] sm:$0xf]
  %v226 = vld [vmem:[%s1 + $0x4c] sm:$0xf]
  %v227 = vld [vmem:[%s1 + $0x50] sm:$0xf]
  %v228 = vld [vmem:[%s1 + $0x54] sm:$0xf]
  %v229 = vld [vmem:[%s1 + $0x58] sm:$0xf]
  %v230 = vld [vmem:[%s1 + $0x5c] sm:$0xf]
  %v231 = vld [vmem:[%s2] sm:$0x1]
  %v233 = vlaneseq
  %v234 = vshrl.u32 %v233, 7
  %v235 = vsub.s32 0, %v234
  %v236 = vrot.slane %v231, %v235
  %v262 = vunpack.c.l.b16 %v207
  %v263 = vunpack.c.l.b16 %v208
  %v264 = vunpack.c.l.b16 %v209
  %v265 = vunpack.c.l.b16 %v210
  %v266 = vunpack.c.l.b16 %v211
  %v267 = vunpack.c.l.b16 %v212
  %v268 = vunpack.c.l.b16 %v213
  %v269 = vunpack.c.l.b16 %v214
  %v270 = vunpack.c.l.b16 %v215
  %v271 = vunpack.c.l.b16 %v216
  %v272 = vunpack.c.l.b16 %v217
  %v273 = vunpack.c.l.b16 %v218
  %v274 = vunpack.c.l.b16 %v219
  %v275 = vunpack.c.l.b16 %v220
  %v276 = vunpack.c.l.b16 %v221
  %v277 = vunpack.c.l.b16 %v222
  %v278 = vunpack.c.l.b16 %v223
  %v279 = vunpack.c.l.b16 %v224
  %v280 = vunpack.c.l.b16 %v225
  %v281 = vunpack.c.l.b16 %v226
  %v282 = vunpack.c.l.b16 %v227
  %v283 = vunpack.c.l.b16 %v228
  %v284 = vunpack.c.l.b16 %v229
  %v285 = vunpack.c.l.b16 %v230
  %v286 = vpack.c.b16 %v263, %v262
  %v287 = vpack.c.b16 %v265, %v264
  %v288 = vpack.c.b16 %v267, %v266
  %v289 = vpack.c.b16 %v269, %v268
  %v290 = vpack.c.b16 %v271, %v270
  %v291 = vpack.c.b16 %v273, %v272
  %v292 = vpack.c.b16 %v275, %v274
  %v293 = vpack.c.b16 %v277, %v276
  %v294 = vpack.c.b16 %v279, %v278
  %v295 = vpack.c.b16 %v281, %v280
  %v296 = vpack.c.b16 %v283, %v282
  %v297 = vpack.c.b16 %v285, %v284
  %vm310 = vcmask 523264
  %v312 = vsel %vm310, %v144, 0
  %v315 = vsel %vm310, %v146, 0
  %v318 = vsel %vm310, %v148, 0
  %v321 = vsel %vm310, %v150, 0
  %v324 = vsel %vm310, %v152, 0
  %v327 = vsel %vm310, %v154, 0
  %v330 = vsel %vm310, %v156, 0
  %v333 = vsel %vm310, %v158, 0
  %v336 = vsel %vm310, %v160, 0
  %v339 = vsel %vm310, %v162, 0
  %v342 = vsel %vm310, %v164, 0
  %v345 = vsel %vm310, %v166, 0
  %v348 = vsel %vm310, %v168, 0
  %v351 = vsel %vm310, %v170, 0
  %v354 = vsel %vm310, %v172, 0
  %v357 = vsel %vm310, %v174, 0
  %v360 = vsel %vm310, %v176, 0
  %v363 = vsel %vm310, %v178, 0
  %v366 = vsel %vm310, %v180, 0
  %v369 = vsel %vm310, %v182, 0
  %v372 = vsel %vm310, %v184, 0
  %v375 = vsel %vm310, %v186, 0
  %v378 = vsel %vm310, %v188, 0
  %v381 = vsel %vm310, %v190, 0
  %v384 = vsel %vm310, %v192, 0
  %v387 = vsel %vm310, %v194, 0
  %v390 = vsel %vm310, %v196, 0
  %v393 = vsel %vm310, %v198, 0
  %v396 = vsel %vm310, %v200, 0
  %v399 = vsel %vm310, %v202, 0
  %v402 = vsel %vm310, %v204, 0
  %v405 = vsel %vm310, %v206, 0
  %407 = vmatprep.subr.bf16.mxu0 0
  %408 = vmatpush1.bf16.msra.mxu0 %v293
  %409 = vmatprep.subr.bf16.mxu0 0
  %410 = vmatpush1.bf16.msra.mxu0 %v292
  %411 = vmatprep.subr.bf16.mxu0 0
  %412 = vmatpush1.bf16.msra.mxu0 %v291
  %413 = vmatprep.subr.bf16.mxu0 0
  %414 = vmatpush1.bf16.msra.mxu0 %v290
  %415 = vmatprep.subr.bf16.mxu0 0
  %416 = vmatpush1.bf16.msra.mxu0 %v289
  %417 = vmatprep.subr.bf16.mxu0 0
  %418 = vmatpush1.bf16.msra.mxu0 %v288
  %419 = vmatprep.subr.bf16.mxu0 0
  %420 = vmatpush1.bf16.msra.mxu0 %v287
  %421 = vmatprep.subr.bf16.mxu0 0
  %422 = vmatpush1.bf16.msra.mxu0 %v286
  %423 = vmatprep.subr.bf16.mxu0 0
  %424 = vmatpush2.bf16.msra.mxu0 0
  %425 = vmatprep.subr.bf16.mxu0 0
  %426 = vmatpush2.bf16.msra.mxu0 0
  %427 = vmatprep.subr.bf16.mxu0 0
  %428 = vmatpush2.bf16.msra.mxu0 0
  %429 = vmatprep.subr.bf16.mxu0 0
  %430 = vmatpush2.bf16.msra.mxu0 0
  %431 = vmatprep.subr.bf16.mxu0 0
  %432 = vmatpush2.bf16.msra.mxu0 %v297
  %433 = vmatprep.subr.bf16.mxu0 0
  %434 = vmatpush2.bf16.msra.mxu0 %v296
  %435 = vmatprep.subr.bf16.mxu0 0
  %436 = vmatpush2.bf16.msra.mxu0 %v295
  %437 = vmatprep.subr.bf16.mxu0 0
  %438 = vmatpush2.bf16.msra.mxu0 %v294
  %439 = vmatprep.mubr.bf16.mxu0 %v312
  %440 = vmatmul.mubr.bf16.gmra.mxu0 %v143
  %v441 = vpop.f32.mrf.mxu0
  %v442 = vadd.f32 %v236, %v441
  %v443 = vpop.f32.mrf.mxu0
  %v444 = vpop.f32.mrf.mxu0
  %v445 = vadd.f32 %v236, %v444
  %v446 = vpop.f32.mrf.mxu0
  %447 = vmatprep.mubr.bf16.mxu0 %v315
  %448 = vmatmul.mubr.bf16.gmra.mxu0 %v145
  %v449 = vpop.f32.mrf.mxu0
  %v450 = vadd.f32 %v236, %v449
  %v451 = vpop.f32.mrf.mxu0
  %v452 = vpop.f32.mrf.mxu0
  %v453 = vadd.f32 %v236, %v452
  %v454 = vpop.f32.mrf.mxu0
  %455 = vmatprep.mubr.bf16.mxu0 %v318
  %456 = vmatmul.mubr.bf16.gmra.mxu0 %v147
  %v457 = vpop.f32.mrf.mxu0
  %v458 = vadd.f32 %v236, %v457
  %v459 = vpop.f32.mrf.mxu0
  %v460 = vpop.f32.mrf.mxu0
  %v461 = vadd.f32 %v236, %v460
  %v462 = vpop.f32.mrf.mxu0
  %463 = vmatprep.mubr.bf16.mxu0 %v321
  %464 = vmatmul.mubr.bf16.gmra.mxu0 %v149
  %v465 = vpop.f32.mrf.mxu0
  %v466 = vadd.f32 %v236, %v465
  %v467 = vpop.f32.mrf.mxu0
  %v468 = vpop.f32.mrf.mxu0
  %v469 = vadd.f32 %v236, %v468
  %v470 = vpop.f32.mrf.mxu0
  %471 = vmatprep.mubr.bf16.mxu0 %v324
  %472 = vmatmul.mubr.bf16.gmra.mxu0 %v151
  %v473 = vpop.f32.mrf.mxu0
  %v474 = vadd.f32 %v236, %v473
  %v475 = vpop.f32.mrf.mxu0
  %v476 = vpop.f32.mrf.mxu0
  %v477 = vadd.f32 %v236, %v476
  %v478 = vpop.f32.mrf.mxu0
  %479 = vmatprep.mubr.bf16.mxu0 %v327
  %480 = vmatmul.mubr.bf16.gmra.mxu0 %v153
  %v481 = vpop.f32.mrf.mxu0
  %v482 = vadd.f32 %v236, %v481
  %v483 = vpop.f32.mrf.mxu0
  %v484 = vpop.f32.mrf.mxu0
  %v485 = vadd.f32 %v236, %v484
  %v486 = vpop.f32.mrf.mxu0
  %487 = vmatprep.mubr.bf16.mxu0 %v330
  %488 = vmatmul.mubr.bf16.gmra.mxu0 %v155
  %v489 = vpop.f32.mrf.mxu0
  %v490 = vadd.f32 %v236, %v489
  %v491 = vpop.f32.mrf.mxu0
  %v492 = vpop.f32.mrf.mxu0
  %v493 = vadd.f32 %v236, %v492
  %v494 = vpop.f32.mrf.mxu0
  %495 = vmatprep.mubr.bf16.mxu0 %v333
  %496 = vmatmul.mubr.bf16.gmra.mxu0 %v157
  %v497 = vpop.f32.mrf.mxu0
  %v498 = vadd.f32 %v236, %v497
  %v499 = vpop.f32.mrf.mxu0
  %v500 = vpop.f32.mrf.mxu0
  %v501 = vadd.f32 %v236, %v500
  %v502 = vpop.f32.mrf.mxu0
  %503 = vmatprep.mubr.bf16.mxu0 %v336
  %504 = vmatmul.mubr.bf16.gmra.mxu0 %v159
  %v505 = vpop.f32.mrf.mxu0
  %v506 = vadd.f32 %v236, %v505
  %v507 = vpop.f32.mrf.mxu0
  %v508 = vpop.f32.mrf.mxu0
  %v509 = vadd.f32 %v236, %v508
  %v510 = vpop.f32.mrf.mxu0
  %511 = vmatprep.mubr.bf16.mxu0 %v339
  %512 = vmatmul.mubr.bf16.gmra.mxu0 %v161
  %v513 = vpop.f32.mrf.mxu0
  %v514 = vadd.f32 %v236, %v513
  %v515 = vpop.f32.mrf.mxu0
  %v516 = vpop.f32.mrf.mxu0
  %v517 = vadd.f32 %v236, %v516
  %v518 = vpop.f32.mrf.mxu0
  %519 = vmatprep.mubr.bf16.mxu0 %v342
  %520 = vmatmul.mubr.bf16.gmra.mxu0 %v163
  %v521 = vpop.f32.mrf.mxu0
  %v522 = vadd.f32 %v236, %v521
  %v523 = vpop.f32.mrf.mxu0
  %v524 = vpop.f32.mrf.mxu0
  %v525 = vadd.f32 %v236, %v524
  %v526 = vpop.f32.mrf.mxu0
  %527 = vmatprep.mubr.bf16.mxu0 %v345
  %528 = vmatmul.mubr.bf16.gmra.mxu0 %v165
  %v529 = vpop.f32.mrf.mxu0
  %v530 = vadd.f32 %v236, %v529
  %v531 = vpop.f32.mrf.mxu0
  %v532 = vpop.f32.mrf.mxu0
  %v533 = vadd.f32 %v236, %v532
  %v534 = vpop.f32.mrf.mxu0
  %535 = vmatprep.mubr.bf16.mxu0 %v348
  %536 = vmatmul.mubr.bf16.gmra.mxu0 %v167
  %v537 = vpop.f32.mrf.mxu0
  %v538 = vadd.f32 %v236, %v537
  %v539 = vpop.f32.mrf.mxu0
  %v540 = vpop.f32.mrf.mxu0
  %v541 = vadd.f32 %v236, %v540
  %v542 = vpop.f32.mrf.mxu0
  %543 = vmatprep.mubr.bf16.mxu0 %v351
  %544 = vmatmul.mubr.bf16.gmra.mxu0 %v169
  %v545 = vpop.f32.mrf.mxu0
  %v546 = vadd.f32 %v236, %v545
  %v547 = vpop.f32.mrf.mxu0
  %v548 = vpop.f32.mrf.mxu0
  %v549 = vadd.f32 %v236, %v548
  %v550 = vpop.f32.mrf.mxu0
  %551 = vmatprep.mubr.bf16.mxu0 %v354
  %552 = vmatmul.mubr.bf16.gmra.mxu0 %v171
  %v553 = vpop.f32.mrf.mxu0
  %v554 = vadd.f32 %v236, %v553
  %v555 = vpop.f32.mrf.mxu0
  %v556 = vpop.f32.mrf.mxu0
  %v557 = vadd.f32 %v236, %v556
  %v558 = vpop.f32.mrf.mxu0
  %559 = vmatprep.mubr.bf16.mxu0 %v357
  %560 = vmatmul.mubr.bf16.gmra.mxu0 %v173
  %v561 = vpop.f32.mrf.mxu0
  %v562 = vadd.f32 %v236, %v561
  %v563 = vpop.f32.mrf.mxu0
  %v564 = vpop.f32.mrf.mxu0
  %v565 = vadd.f32 %v236, %v564
  %v566 = vpop.f32.mrf.mxu0
  %567 = vmatprep.mubr.bf16.mxu0 %v360
  %568 = vmatmul.mubr.bf16.gmra.mxu0 %v175
  %v569 = vpop.f32.mrf.mxu0
  %v570 = vadd.f32 %v236, %v569
  %v571 = vpop.f32.mrf.mxu0
  %v572 = vpop.f32.mrf.mxu0
  %v573 = vadd.f32 %v236, %v572
  %v574 = vpop.f32.mrf.mxu0
  %575 = vmatprep.mubr.bf16.mxu0 %v363
  %576 = vmatmul.mubr.bf16.gmra.mxu0 %v177
  %v577 = vpop.f32.mrf.mxu0
  %v578 = vadd.f32 %v236, %v577
  %v579 = vpop.f32.mrf.mxu0
  %v580 = vpop.f32.mrf.mxu0
  %v581 = vadd.f32 %v236, %v580
  %v582 = vpop.f32.mrf.mxu0
  %583 = vmatprep.mubr.bf16.mxu0 %v366
  %584 = vmatmul.mubr.bf16.gmra.mxu0 %v179
  %v585 = vpop.f32.mrf.mxu0
  %v586 = vadd.f32 %v236, %v585
  %v587 = vpop.f32.mrf.mxu0
  %v588 = vpop.f32.mrf.mxu0
  %v589 = vadd.f32 %v236, %v588
  %v590 = vpop.f32.mrf.mxu0
  %591 = vmatprep.mubr.bf16.mxu0 %v369
  %592 = vmatmul.mubr.bf16.gmra.mxu0 %v181
  %v593 = vpop.f32.mrf.mxu0
  %v594 = vadd.f32 %v236, %v593
  %v595 = vpop.f32.mrf.mxu0
  %v596 = vpop.f32.mrf.mxu0
  %v597 = vadd.f32 %v236, %v596
  %v598 = vpop.f32.mrf.mxu0
  %599 = vmatprep.mubr.bf16.mxu0 %v372
  %600 = vmatmul.mubr.bf16.gmra.mxu0 %v183
  %v601 = vpop.f32.mrf.mxu0
  %v602 = vadd.f32 %v236, %v601
  %v603 = vpop.f32.mrf.mxu0
  %v604 = vpop.f32.mrf.mxu0
  %v605 = vadd.f32 %v236, %v604
  %v606 = vpop.f32.mrf.mxu0
  %607 = vmatprep.mubr.bf16.mxu0 %v375
  %608 = vmatmul.mubr.bf16.gmra.mxu0 %v185
  %v609 = vpop.f32.mrf.mxu0
  %v610 = vadd.f32 %v236, %v609
  %v611 = vpop.f32.mrf.mxu0
  %v612 = vpop.f32.mrf.mxu0
  %v613 = vadd.f32 %v236, %v612
  %v614 = vpop.f32.mrf.mxu0
  %615 = vmatprep.mubr.bf16.mxu0 %v378
  %616 = vmatmul.mubr.bf16.gmra.mxu0 %v187
  %v617 = vpop.f32.mrf.mxu0
  %v618 = vadd.f32 %v236, %v617
  %v619 = vpop.f32.mrf.mxu0
  %v620 = vpop.f32.mrf.mxu0
  %v621 = vadd.f32 %v236, %v620
  %v622 = vpop.f32.mrf.mxu0
  %623 = vmatprep.mubr.bf16.mxu0 %v381
  %624 = vmatmul.mubr.bf16.gmra.mxu0 %v189
  %v625 = vpop.f32.mrf.mxu0
  %v626 = vadd.f32 %v236, %v625
  %v627 = vpop.f32.mrf.mxu0
  %v628 = vpop.f32.mrf.mxu0
  %v629 = vadd.f32 %v236, %v628
  %v630 = vpop.f32.mrf.mxu0
  %631 = vmatprep.mubr.bf16.mxu0 %v384
  %632 = vmatmul.mubr.bf16.gmra.mxu0 %v191
  %v633 = vpop.f32.mrf.mxu0
  %v634 = vadd.f32 %v236, %v633
  %v635 = vpop.f32.mrf.mxu0
  %v636 = vpop.f32.mrf.mxu0
  %v637 = vadd.f32 %v236, %v636
  %v638 = vpop.f32.mrf.mxu0
  %639 = vmatprep.mubr.bf16.mxu0 %v387
  %640 = vmatmul.mubr.bf16.gmra.mxu0 %v193
  %v641 = vpop.f32.mrf.mxu0
  %v642 = vadd.f32 %v236, %v641
  %v643 = vpop.f32.mrf.mxu0
  %v644 = vpop.f32.mrf.mxu0
  %v645 = vadd.f32 %v236, %v644
  %v646 = vpop.f32.mrf.mxu0
  %647 = vmatprep.mubr.bf16.mxu0 %v390
  %648 = vmatmul.mubr.bf16.gmra.mxu0 %v195
  %v649 = vpop.f32.mrf.mxu0
  %v650 = vadd.f32 %v236, %v649
  %v651 = vpop.f32.mrf.mxu0
  %v652 = vpop.f32.mrf.mxu0
  %v653 = vadd.f32 %v236, %v652
  %v654 = vpop.f32.mrf.mxu0
  %655 = vmatprep.mubr.bf16.mxu0 %v393
  %656 = vmatmul.mubr.bf16.gmra.mxu0 %v197
  %v657 = vpop.f32.mrf.mxu0
  %v658 = vadd.f32 %v236, %v657
  %v659 = vpop.f32.mrf.mxu0
  %v660 = vpop.f32.mrf.mxu0
  %v661 = vadd.f32 %v236, %v660
  %v662 = vpop.f32.mrf.mxu0
  %663 = vmatprep.mubr.bf16.mxu0 %v396
  %664 = vmatmul.mubr.bf16.gmra.mxu0 %v199
  %v665 = vpop.f32.mrf.mxu0
  %v666 = vadd.f32 %v236, %v665
  %v667 = vpop.f32.mrf.mxu0
  %v668 = vpop.f32.mrf.mxu0
  %v669 = vadd.f32 %v236, %v668
  %v670 = vpop.f32.mrf.mxu0
  %671 = vmatprep.mubr.bf16.mxu0 %v399
  %672 = vmatmul.mubr.bf16.gmra.mxu0 %v201
  %v673 = vpop.f32.mrf.mxu0
  %v674 = vadd.f32 %v236, %v673
  %v675 = vpop.f32.mrf.mxu0
  %v676 = vpop.f32.mrf.mxu0
  %v677 = vadd.f32 %v236, %v676
  %v678 = vpop.f32.mrf.mxu0
  %679 = vmatprep.mubr.bf16.mxu0 %v402
  %680 = vmatmul.mubr.bf16.gmra.mxu0 %v203
  %v681 = vpop.f32.mrf.mxu0
  %v682 = vadd.f32 %v236, %v681
  %v683 = vpop.f32.mrf.mxu0
  %v684 = vpop.f32.mrf.mxu0
  %v685 = vadd.f32 %v236, %v684
  %v686 = vpop.f32.mrf.mxu0
  %687 = vmatprep.mubr.bf16.mxu0 %v405
  %688 = vmatmul.mubr.bf16.gmra.mxu0 %v205
  %v689 = vpop.f32.mrf.mxu0
  %v690 = vadd.f32 %v236, %v689
  %v691 = vpop.f32.mrf.mxu0
  %v692 = vpop.f32.mrf.mxu0
  %v693 = vadd.f32 %v236, %v692
  %v694 = vpop.f32.mrf.mxu0
  %695 = vdwg.mxu0
  %v696 = vxor.u32 %v442, 2147483648
  %v697 = vxor.u32 %v445, 2147483648
  %v698 = vxor.u32 %v450, 2147483648
  %v699 = vxor.u32 %v453, 2147483648
  %v700 = vxor.u32 %v458, 2147483648
  %v701 = vxor.u32 %v461, 2147483648
  %v702 = vxor.u32 %v466, 2147483648
  %v703 = vxor.u32 %v469, 2147483648
  %v704 = vxor.u32 %v474, 2147483648
  %v705 = vxor.u32 %v477, 2147483648
  %v706 = vxor.u32 %v482, 2147483648
  %v707 = vxor.u32 %v485, 2147483648
  %v708 = vxor.u32 %v490, 2147483648
  %v709 = vxor.u32 %v493, 2147483648
  %v710 = vxor.u32 %v498, 2147483648
  %v711 = vxor.u32 %v501, 2147483648
  %v712 = vxor.u32 %v506, 2147483648
  %v713 = vxor.u32 %v509, 2147483648
  %v714 = vxor.u32 %v514, 2147483648
  %v715 = vxor.u32 %v517, 2147483648
  %v716 = vxor.u32 %v522, 2147483648
  %v717 = vxor.u32 %v525, 2147483648
  %v718 = vxor.u32 %v530, 2147483648
  %v719 = vxor.u32 %v533, 2147483648
  %v720 = vxor.u32 %v538, 2147483648
  %v721 = vxor.u32 %v541, 2147483648
  %v722 = vxor.u32 %v546, 2147483648
  %v723 = vxor.u32 %v549, 2147483648
  %v724 = vxor.u32 %v554, 2147483648
  %v725 = vxor.u32 %v557, 2147483648
  %v726 = vxor.u32 %v562, 2147483648
  %v727 = vxor.u32 %v565, 2147483648
  %v728 = vxor.u32 %v570, 2147483648
  %v729 = vxor.u32 %v573, 2147483648
  %v730 = vxor.u32 %v578, 2147483648
  %v731 = vxor.u32 %v581, 2147483648
  %v732 = vxor.u32 %v586, 2147483648
  %v733 = vxor.u32 %v589, 2147483648
  %v734 = vxor.u32 %v594, 2147483648
  %v735 = vxor.u32 %v597, 2147483648
  %v736 = vxor.u32 %v602, 2147483648
  %v737 = vxor.u32 %v605, 2147483648
  %v738 = vxor.u32 %v610, 2147483648
  %v739 = vxor.u32 %v613, 2147483648
  %v740 = vxor.u32 %v618, 2147483648
  %v741 = vxor.u32 %v621, 2147483648
  %v742 = vxor.u32 %v626, 2147483648
  %v743 = vxor.u32 %v629, 2147483648
  %v744 = vxor.u32 %v634, 2147483648
  %v745 = vxor.u32 %v637, 2147483648
  %v746 = vxor.u32 %v642, 2147483648
  %v747 = vxor.u32 %v645, 2147483648
  %v748 = vxor.u32 %v650, 2147483648
  %v749 = vxor.u32 %v653, 2147483648
  %v750 = vxor.u32 %v658, 2147483648
  %v751 = vxor.u32 %v661, 2147483648
  %v752 = vxor.u32 %v666, 2147483648
  %v753 = vxor.u32 %v669, 2147483648
  %v754 = vxor.u32 %v674, 2147483648
  %v755 = vxor.u32 %v677, 2147483648
  %v756 = vxor.u32 %v682, 2147483648
  %v757 = vxor.u32 %v685, 2147483648
  %v758 = vxor.u32 %v690, 2147483648
  %v759 = vxor.u32 %v693, 2147483648
  %v760 = vmul.f32 %v696, 1.442695
  %v761 = vpow.pop %v760
  %v762 = vmul.f32 %v697, 1.442695
  %v763 = vpow.pop %v762
  %v764 = vmul.f32 %v698, 1.442695
  %v765 = vpow.pop %v764
  %v766 = vmul.f32 %v699, 1.442695
  %v767 = vpow.pop %v766
  %v768 = vmul.f32 %v700, 1.442695
  %v769 = vpow.pop %v768
  %v770 = vmul.f32 %v701, 1.442695
  %v771 = vpow.pop %v770
  %v772 = vmul.f32 %v702, 1.442695
  %v773 = vpow.pop %v772
  %v774 = vmul.f32 %v703, 1.442695
  %v775 = vpow.pop %v774
  %v776 = vmul.f32 %v704, 1.442695
  %v777 = vpow.pop %v776
  %v778 = vmul.f32 %v705, 1.442695
  %v779 = vpow.pop %v778
  %v780 = vmul.f32 %v706, 1.442695
  %v781 = vpow.pop %v780
  %v782 = vmul.f32 %v707, 1.442695
  %v783 = vpow.pop %v782
  %v784 = vmul.f32 %v708, 1.442695
  %v785 = vpow.pop %v784
  %v786 = vmul.f32 %v709, 1.442695
  %v787 = vpow.pop %v786
  %v788 = vmul.f32 %v710, 1.442695
  %v789 = vpow.pop %v788
  %v790 = vmul.f32 %v711, 1.442695
  %v791 = vpow.pop %v790
  %v792 = vmul.f32 %v712, 1.442695
  %v793 = vpow.pop %v792
  %v794 = vmul.f32 %v713, 1.442695
  %v795 = vpow.pop %v794
  %v796 = vmul.f32 %v714, 1.442695
  %v797 = vpow.pop %v796
  %v798 = vmul.f32 %v715, 1.442695
  %v799 = vpow.pop %v798
  %v800 = vmul.f32 %v716, 1.442695
  %v801 = vpow.pop %v800
  %v802 = vmul.f32 %v717, 1.442695
  %v803 = vpow.pop %v802
  %v804 = vmul.f32 %v718, 1.442695
  %v805 = vpow.pop %v804
  %v806 = vmul.f32 %v719, 1.442695
  %v807 = vpow.pop %v806
  %v808 = vmul.f32 %v720, 1.442695
  %v809 = vpow.pop %v808
  %v810 = vmul.f32 %v721, 1.442695
  %v811 = vpow.pop %v810
  %v812 = vmul.f32 %v722, 1.442695
  %v813 = vpow.pop %v812
  %v814 = vmul.f32 %v723, 1.442695
  %v815 = vpow.pop %v814
  %v816 = vmul.f32 %v724, 1.442695
  %v817 = vpow.pop %v816
  %v818 = vmul.f32 %v725, 1.442695
  %v819 = vpow.pop %v818
  %v820 = vmul.f32 %v726, 1.442695
  %v821 = vpow.pop %v820
  %v822 = vmul.f32 %v727, 1.442695
  %v823 = vpow.pop %v822
  %v824 = vmul.f32 %v728, 1.442695
  %v825 = vpow.pop %v824
  %v826 = vmul.f32 %v729, 1.442695
  %v827 = vpow.pop %v826
  %v828 = vmul.f32 %v730, 1.442695
  %v829 = vpow.pop %v828
  %v830 = vmul.f32 %v731, 1.442695
  %v831 = vpow.pop %v830
  %v832 = vmul.f32 %v732, 1.442695
  %v833 = vpow.pop %v832
  %v834 = vmul.f32 %v733, 1.442695
  %v835 = vpow.pop %v834
  %v836 = vmul.f32 %v734, 1.442695
  %v837 = vpow.pop %v836
  %v838 = vmul.f32 %v735, 1.442695
  %v839 = vpow.pop %v838
  %v840 = vmul.f32 %v736, 1.442695
  %v841 = vpow.pop %v840
  %v842 = vmul.f32 %v737, 1.442695
  %v843 = vpow.pop %v842
  %v844 = vmul.f32 %v738, 1.442695
  %v845 = vpow.pop %v844
  %v846 = vmul.f32 %v739, 1.442695
  %v847 = vpow.pop %v846
  %v848 = vmul.f32 %v740, 1.442695
  %v849 = vpow.pop %v848
  %v850 = vmul.f32 %v741, 1.442695
  %v851 = vpow.pop %v850
  %v852 = vmul.f32 %v742, 1.442695
  %v853 = vpow.pop %v852
  %v854 = vmul.f32 %v743, 1.442695
  %v855 = vpow.pop %v854
  %v856 = vmul.f32 %v744, 1.442695
  %v857 = vpow.pop %v856
  %v858 = vmul.f32 %v745, 1.442695
  %v859 = vpow.pop %v858
  %v860 = vmul.f32 %v746, 1.442695
  %v861 = vpow.pop %v860
  %v862 = vmul.f32 %v747, 1.442695
  %v863 = vpow.pop %v862
  %v864 = vmul.f32 %v748, 1.442695
  %v865 = vpow.pop %v864
  %v866 = vmul.f32 %v749, 1.442695
  %v867 = vpow.pop %v866
  %v868 = vmul.f32 %v750, 1.442695
  %v869 = vpow.pop %v868
  %v870 = vmul.f32 %v751, 1.442695
  %v871 = vpow.pop %v870
  %v872 = vmul.f32 %v752, 1.442695
  %v873 = vpow.pop %v872
  %v874 = vmul.f32 %v753, 1.442695
  %v875 = vpow.pop %v874
  %v876 = vmul.f32 %v754, 1.442695
  %v877 = vpow.pop %v876
  %v878 = vmul.f32 %v755, 1.442695
  %v879 = vpow.pop %v878
  %v880 = vmul.f32 %v756, 1.442695
  %v881 = vpow.pop %v880
  %v882 = vmul.f32 %v757, 1.442695
  %v883 = vpow.pop %v882
  %v884 = vmul.f32 %v758, 1.442695
  %v885 = vpow.pop %v884
  %v886 = vmul.f32 %v759, 1.442695
  %v887 = vpow.pop %v886
  %v888 = vadd.f32 %v761, 1.0
  %v889 = vadd.f32 %v763, 1.0
  %v890 = vadd.f32 %v765, 1.0
  %v891 = vadd.f32 %v767, 1.0
  %v892 = vadd.f32 %v769, 1.0
  %v893 = vadd.f32 %v771, 1.0
  %v894 = vadd.f32 %v773, 1.0
  %v895 = vadd.f32 %v775, 1.0
  %v896 = vadd.f32 %v777, 1.0
  %v897 = vadd.f32 %v779, 1.0
  %v898 = vadd.f32 %v781, 1.0
  %v899 = vadd.f32 %v783, 1.0
  %v900 = vadd.f32 %v785, 1.0
  %v901 = vadd.f32 %v787, 1.0
  %v902 = vadd.f32 %v789, 1.0
  %v903 = vadd.f32 %v791, 1.0
  %v904 = vadd.f32 %v793, 1.0
  %v905 = vadd.f32 %v795, 1.0
  %v906 = vadd.f32 %v797, 1.0
  %v907 = vadd.f32 %v799, 1.0
  %v908 = vadd.f32 %v801, 1.0
  %v909 = vadd.f32 %v803, 1.0
  %v910 = vadd.f32 %v805, 1.0
  %v911 = vadd.f32 %v807, 1.0
  %v912 = vadd.f32 %v809, 1.0
  %v913 = vadd.f32 %v811, 1.0
  %v914 = vadd.f32 %v813, 1.0
  %v915 = vadd.f32 %v815, 1.0
  %v916 = vadd.f32 %v817, 1.0
  %v917 = vadd.f32 %v819, 1.0
  %v918 = vadd.f32 %v821, 1.0
  %v919 = vadd.f32 %v823, 1.0
  %v920 = vadd.f32 %v825, 1.0
  %v921 = vadd.f32 %v827, 1.0
  %v922 = vadd.f32 %v829, 1.0
  %v923 = vadd.f32 %v831, 1.0
  %v924 = vadd.f32 %v833, 1.0
  %v925 = vadd.f32 %v835, 1.0
  %v926 = vadd.f32 %v837, 1.0
  %v927 = vadd.f32 %v839, 1.0
  %v928 = vadd.f32 %v841, 1.0
  %v929 = vadd.f32 %v843, 1.0
  %v930 = vadd.f32 %v845, 1.0
  %v931 = vadd.f32 %v847, 1.0
  %v932 = vadd.f32 %v849, 1.0
  %v933 = vadd.f32 %v851, 1.0
  %v934 = vadd.f32 %v853, 1.0
  %v935 = vadd.f32 %v855, 1.0
  %v936 = vadd.f32 %v857, 1.0
  %v937 = vadd.f32 %v859, 1.0
  %v938 = vadd.f32 %v861, 1.0
  %v939 = vadd.f32 %v863, 1.0
  %v940 = vadd.f32 %v865, 1.0
  %v941 = vadd.f32 %v867, 1.0
  %v942 = vadd.f32 %v869, 1.0
  %v943 = vadd.f32 %v871, 1.0
  %v944 = vadd.f32 %v873, 1.0
  %v945 = vadd.f32 %v875, 1.0
  %v946 = vadd.f32 %v877, 1.0
  %v947 = vadd.f32 %v879, 1.0
  %v948 = vadd.f32 %v881, 1.0
  %v949 = vadd.f32 %v883, 1.0
  %v950 = vadd.f32 %v885, 1.0
  %v951 = vadd.f32 %v887, 1.0
  %v952 = vrcp.pop %v888
  %v953 = vmul.f32 1.0, %v952
  %v954 = vrcp.pop %v889
  %v955 = vmul.f32 1.0, %v954
  %v956 = vrcp.pop %v890
  %v957 = vmul.f32 1.0, %v956
  %v958 = vrcp.pop %v891
  %v959 = vmul.f32 1.0, %v958
  %v960 = vrcp.pop %v892
  %v961 = vmul.f32 1.0, %v960
  %v962 = vrcp.pop %v893
  %v963 = vmul.f32 1.0, %v962
  %v964 = vrcp.pop %v894
  %v965 = vmul.f32 1.0, %v964
  %v966 = vrcp.pop %v895
  %v967 = vmul.f32 1.0, %v966
  %v968 = vrcp.pop %v896
  %v969 = vmul.f32 1.0, %v968
  %v970 = vrcp.pop %v897
  %v971 = vmul.f32 1.0, %v970
  %v972 = vrcp.pop %v898
  %v973 = vmul.f32 1.0, %v972
  %v974 = vrcp.pop %v899
  %v975 = vmul.f32 1.0, %v974
  %v976 = vrcp.pop %v900
  %v977 = vmul.f32 1.0, %v976
  %v978 = vrcp.pop %v901
  %v979 = vmul.f32 1.0, %v978
  %v980 = vrcp.pop %v902
  %v981 = vmul.f32 1.0, %v980
  %v982 = vrcp.pop %v903
  %v983 = vmul.f32 1.0, %v982
  %v984 = vrcp.pop %v904
  %v985 = vmul.f32 1.0, %v984
  %v986 = vrcp.pop %v905
  %v987 = vmul.f32 1.0, %v986
  %v988 = vrcp.pop %v906
  %v989 = vmul.f32 1.0, %v988
  %v990 = vrcp.pop %v907
  %v991 = vmul.f32 1.0, %v990
  %v992 = vrcp.pop %v908
  %v993 = vmul.f32 1.0, %v992
  %v994 = vrcp.pop %v909
  %v995 = vmul.f32 1.0, %v994
  %v996 = vrcp.pop %v910
  %v997 = vmul.f32 1.0, %v996
  %v998 = vrcp.pop %v911
  %v999 = vmul.f32 1.0, %v998
  %v1000 = vrcp.pop %v912
  %v1001 = vmul.f32 1.0, %v1000
  %v1002 = vrcp.pop %v913
  %v1003 = vmul.f32 1.0, %v1002
  %v1004 = vrcp.pop %v914
  %v1005 = vmul.f32 1.0, %v1004
  %v1006 = vrcp.pop %v915
  %v1007 = vmul.f32 1.0, %v1006
  %v1008 = vrcp.pop %v916
  %v1009 = vmul.f32 1.0, %v1008
  %v1010 = vrcp.pop %v917
  %v1011 = vmul.f32 1.0, %v1010
  %v1012 = vrcp.pop %v918
  %v1013 = vmul.f32 1.0, %v1012
  %v1014 = vrcp.pop %v919
  %v1015 = vmul.f32 1.0, %v1014
  %v1016 = vrcp.pop %v920
  %v1017 = vmul.f32 1.0, %v1016
  %v1018 = vrcp.pop %v921
  %v1019 = vmul.f32 1.0, %v1018
  %v1020 = vrcp.pop %v922
  %v1021 = vmul.f32 1.0, %v1020
  %v1022 = vrcp.pop %v923
  %v1023 = vmul.f32 1.0, %v1022
  %v1024 = vrcp.pop %v924
  %v1025 = vmul.f32 1.0, %v1024
  %v1026 = vrcp.pop %v925
  %v1027 = vmul.f32 1.0, %v1026
  %v1028 = vrcp.pop %v926
  %v1029 = vmul.f32 1.0, %v1028
  %v1030 = vrcp.pop %v927
  %v1031 = vmul.f32 1.0, %v1030
  %v1032 = vrcp.pop %v928
  %v1033 = vmul.f32 1.0, %v1032
  %v1034 = vrcp.pop %v929
  %v1035 = vmul.f32 1.0, %v1034
  %v1036 = vrcp.pop %v930
  %v1037 = vmul.f32 1.0, %v1036
  %v1038 = vrcp.pop %v931
  %v1039 = vmul.f32 1.0, %v1038
  %v1040 = vrcp.pop %v932
  %v1041 = vmul.f32 1.0, %v1040
  %v1042 = vrcp.pop %v933
  %v1043 = vmul.f32 1.0, %v1042
  %v1044 = vrcp.pop %v934
  %v1045 = vmul.f32 1.0, %v1044
  %v1046 = vrcp.pop %v935
  %v1047 = vmul.f32 1.0, %v1046
  %v1048 = vrcp.pop %v936
  %v1049 = vmul.f32 1.0, %v1048
  %v1050 = vrcp.pop %v937
  %v1051 = vmul.f32 1.0, %v1050
  %v1052 = vrcp.pop %v938
  %v1053 = vmul.f32 1.0, %v1052
  %v1054 = vrcp.pop %v939
  %v1055 = vmul.f32 1.0, %v1054
  %v1056 = vrcp.pop %v940
  %v1057 = vmul.f32 1.0, %v1056
  %v1058 = vrcp.pop %v941
  %v1059 = vmul.f32 1.0, %v1058
  %v1060 = vrcp.pop %v942
  %v1061 = vmul.f32 1.0, %v1060
  %v1062 = vrcp.pop %v943
  %v1063 = vmul.f32 1.0, %v1062
  %v1064 = vrcp.pop %v944
  %v1065 = vmul.f32 1.0, %v1064
  %v1066 = vrcp.pop %v945
  %v1067 = vmul.f32 1.0, %v1066
  %v1068 = vrcp.pop %v946
  %v1069 = vmul.f32 1.0, %v1068
  %v1070 = vrcp.pop %v947
  %v1071 = vmul.f32 1.0, %v1070
  %v1072 = vrcp.pop %v948
  %v1073 = vmul.f32 1.0, %v1072
  %v1074 = vrcp.pop %v949
  %v1075 = vmul.f32 1.0, %v1074
  %v1076 = vrcp.pop %v950
  %v1077 = vmul.f32 1.0, %v1076
  %v1078 = vrcp.pop %v951
  %v1079 = vmul.f32 1.0, %v1078
  %v1080 = vmul.f32 %v442, %v953
  %v1081 = vmul.f32 %v445, %v955
  %v1082 = vmul.f32 %v450, %v957
  %v1083 = vmul.f32 %v453, %v959
  %v1084 = vmul.f32 %v458, %v961
  %v1085 = vmul.f32 %v461, %v963
  %v1086 = vmul.f32 %v466, %v965
  %v1087 = vmul.f32 %v469, %v967
  %v1088 = vmul.f32 %v474, %v969
  %v1089 = vmul.f32 %v477, %v971
  %v1090 = vmul.f32 %v482, %v973
  %v1091 = vmul.f32 %v485, %v975
  %v1092 = vmul.f32 %v490, %v977
  %v1093 = vmul.f32 %v493, %v979
  %v1094 = vmul.f32 %v498, %v981
  %v1095 = vmul.f32 %v501, %v983
  %v1096 = vmul.f32 %v506, %v985
  %v1097 = vmul.f32 %v509, %v987
  %v1098 = vmul.f32 %v514, %v989
  %v1099 = vmul.f32 %v517, %v991
  %v1100 = vmul.f32 %v522, %v993
  %v1101 = vmul.f32 %v525, %v995
  %v1102 = vmul.f32 %v530, %v997
  %v1103 = vmul.f32 %v533, %v999
  %v1104 = vmul.f32 %v538, %v1001
  %v1105 = vmul.f32 %v541, %v1003
  %v1106 = vmul.f32 %v546, %v1005
  %v1107 = vmul.f32 %v549, %v1007
  %v1108 = vmul.f32 %v554, %v1009
  %v1109 = vmul.f32 %v557, %v1011
  %v1110 = vmul.f32 %v562, %v1013
  %v1111 = vmul.f32 %v565, %v1015
  %v1112 = vmul.f32 %v570, %v1017
  %v1113 = vmul.f32 %v573, %v1019
  %v1114 = vmul.f32 %v578, %v1021
  %v1115 = vmul.f32 %v581, %v1023
  %v1116 = vmul.f32 %v586, %v1025
  %v1117 = vmul.f32 %v589, %v1027
  %v1118 = vmul.f32 %v594, %v1029
  %v1119 = vmul.f32 %v597, %v1031
  %v1120 = vmul.f32 %v602, %v1033
  %v1121 = vmul.f32 %v605, %v1035
  %v1122 = vmul.f32 %v610, %v1037
  %v1123 = vmul.f32 %v613, %v1039
  %v1124 = vmul.f32 %v618, %v1041
  %v1125 = vmul.f32 %v621, %v1043
  %v1126 = vmul.f32 %v626, %v1045
  %v1127 = vmul.f32 %v629, %v1047
  %v1128 = vmul.f32 %v634, %v1049
  %v1129 = vmul.f32 %v637, %v1051
  %v1130 = vmul.f32 %v642, %v1053
  %v1131 = vmul.f32 %v645, %v1055
  %v1132 = vmul.f32 %v650, %v1057
  %v1133 = vmul.f32 %v653, %v1059
  %v1134 = vmul.f32 %v658, %v1061
  %v1135 = vmul.f32 %v661, %v1063
  %v1136 = vmul.f32 %v666, %v1065
  %v1137 = vmul.f32 %v669, %v1067
  %v1138 = vmul.f32 %v674, %v1069
  %v1139 = vmul.f32 %v677, %v1071
  %v1140 = vmul.f32 %v682, %v1073
  %v1141 = vmul.f32 %v685, %v1075
  %v1142 = vmul.f32 %v690, %v1077
  %v1143 = vmul.f32 %v693, %v1079
  %vm1144 = vcmask 326656
  %1145 = vst.msk [vmem:[%s3] sm:$0xff] %vm1144, %v1080
  %1146 = vst.msk [vmem:[%s3 + $0x8] sm:$0xff] %vm1144, %v1081
  %1147 = vst.msk [vmem:[%s3 + $0x10] sm:$0xff] %vm1144, %v1082
  %1148 = vst.msk [vmem:[%s3 + $0x18] sm:$0xff] %vm1144, %v1083
  %1149 = vst.msk [vmem:[%s3 + $0x20] sm:$0xff] %vm1144, %v1084
  %1150 = vst.msk [vmem:[%s3 + $0x28] sm:$0xff] %vm1144, %v1085
  %1151 = vst.msk [vmem:[%s3 + $0x30] sm:$0xff] %vm1144, %v1086
  %1152 = vst.msk [vmem:[%s3 + $0x38] sm:$0xff] %vm1144, %v1087
  %1153 = vst.msk [vmem:[%s3 + $0x40] sm:$0xff] %vm1144, %v1088
  %1154 = vst.msk [vmem:[%s3 + $0x48] sm:$0xff] %vm1144, %v1089
  %1155 = vst.msk [vmem:[%s3 + $0x50] sm:$0xff] %vm1144, %v1090
  %1156 = vst.msk [vmem:[%s3 + $0x58] sm:$0xff] %vm1144, %v1091
  %1157 = vst.msk [vmem:[%s3 + $0x60] sm:$0xff] %vm1144, %v1092
  %1158 = vst.msk [vmem:[%s3 + $0x68] sm:$0xff] %vm1144, %v1093
  %1159 = vst.msk [vmem:[%s3 + $0x70] sm:$0xff] %vm1144, %v1094
  %1160 = vst.msk [vmem:[%s3 + $0x78] sm:$0xff] %vm1144, %v1095
  %1161 = vst.msk [vmem:[%s3 + $0x80] sm:$0xff] %vm1144, %v1096
  %1162 = vst.msk [vmem:[%s3 + $0x88] sm:$0xff] %vm1144, %v1097
  %1163 = vst.msk [vmem:[%s3 + $0x90] sm:$0xff] %vm1144, %v1098
  %1164 = vst.msk [vmem:[%s3 + $0x98] sm:$0xff] %vm1144, %v1099
  %1165 = vst.msk [vmem:[%s3 + $0xa0] sm:$0xff] %vm1144, %v1100
  %1166 = vst.msk [vmem:[%s3 + $0xa8] sm:$0xff] %vm1144, %v1101
  %1167 = vst.msk [vmem:[%s3 + $0xb0] sm:$0xff] %vm1144, %v1102
  %1168 = vst.msk [vmem:[%s3 + $0xb8] sm:$0xff] %vm1144, %v1103
  %1169 = vst.msk [vmem:[%s3 + $0xc0] sm:$0xff] %vm1144, %v1104
  %1170 = vst.msk [vmem:[%s3 + $0xc8] sm:$0xff] %vm1144, %v1105
  %1171 = vst.msk [vmem:[%s3 + $0xd0] sm:$0xff] %vm1144, %v1106
  %1172 = vst.msk [vmem:[%s3 + $0xd8] sm:$0xff] %vm1144, %v1107
  %1173 = vst.msk [vmem:[%s3 + $0xe0] sm:$0xff] %vm1144, %v1108
  %1174 = vst.msk [vmem:[%s3 + $0xe8] sm:$0xff] %vm1144, %v1109
  %1175 = vst.msk [vmem:[%s3 + $0xf0] sm:$0xff] %vm1144, %v1110
  %1176 = vst.msk [vmem:[%s3 + $0xf8] sm:$0xff] %vm1144, %v1111
  %1177 = vst.msk [vmem:[%s3 + $0x100] sm:$0xff] %vm1144, %v1112
  %1178 = vst.msk [vmem:[%s3 + $0x108] sm:$0xff] %vm1144, %v1113
  %1179 = vst.msk [vmem:[%s3 + $0x110] sm:$0xff] %vm1144, %v1114
  %1180 = vst.msk [vmem:[%s3 + $0x118] sm:$0xff] %vm1144, %v1115
  %1181 = vst.msk [vmem:[%s3 + $0x120] sm:$0xff] %vm1144, %v1116
  %1182 = vst.msk [vmem:[%s3 + $0x128] sm:$0xff] %vm1144, %v1117
  %1183 = vst.msk [vmem:[%s3 + $0x130] sm:$0xff] %vm1144, %v1118
  %1184 = vst.msk [vmem:[%s3 + $0x138] sm:$0xff] %vm1144, %v1119
  %1185 = vst.msk [vmem:[%s3 + $0x140] sm:$0xff] %vm1144, %v1120
  %1186 = vst.msk [vmem:[%s3 + $0x148] sm:$0xff] %vm1144, %v1121
  %1187 = vst.msk [vmem:[%s3 + $0x150] sm:$0xff] %vm1144, %v1122
  %1188 = vst.msk [vmem:[%s3 + $0x158] sm:$0xff] %vm1144, %v1123
  %1189 = vst.msk [vmem:[%s3 + $0x160] sm:$0xff] %vm1144, %v1124
  %1190 = vst.msk [vmem:[%s3 + $0x168] sm:$0xff] %vm1144, %v1125
  %1191 = vst.msk [vmem:[%s3 + $0x170] sm:$0xff] %vm1144, %v1126
  %1192 = vst.msk [vmem:[%s3 + $0x178] sm:$0xff] %vm1144, %v1127
  %1193 = vst.msk [vmem:[%s3 + $0x180] sm:$0xff] %vm1144, %v1128
  %1194 = vst.msk [vmem:[%s3 + $0x188] sm:$0xff] %vm1144, %v1129
  %1195 = vst.msk [vmem:[%s3 + $0x190] sm:$0xff] %vm1144, %v1130
  %1196 = vst.msk [vmem:[%s3 + $0x198] sm:$0xff] %vm1144, %v1131
  %1197 = vst.msk [vmem:[%s3 + $0x1a0] sm:$0xff] %vm1144, %v1132
  %1198 = vst.msk [vmem:[%s3 + $0x1a8] sm:$0xff] %vm1144, %v1133
  %1199 = vst.msk [vmem:[%s3 + $0x1b0] sm:$0xff] %vm1144, %v1134
  %1200 = vst.msk [vmem:[%s3 + $0x1b8] sm:$0xff] %vm1144, %v1135
  %1201 = vst.msk [vmem:[%s3 + $0x1c0] sm:$0xff] %vm1144, %v1136
  %1202 = vst.msk [vmem:[%s3 + $0x1c8] sm:$0xff] %vm1144, %v1137
  %1203 = vst.msk [vmem:[%s3 + $0x1d0] sm:$0xff] %vm1144, %v1138
  %1204 = vst.msk [vmem:[%s3 + $0x1d8] sm:$0xff] %vm1144, %v1139
  %1205 = vst.msk [vmem:[%s3 + $0x1e0] sm:$0xff] %vm1144, %v1140
  %1206 = vst.msk [vmem:[%s3 + $0x1e8] sm:$0xff] %vm1144, %v1141
  %1207 = vst.msk [vmem:[%s3 + $0x1f0] sm:$0xff] %vm1144, %v1142
  %1208 = vst.msk [vmem:[%s3 + $0x1f8] sm:$0xff] %vm1144, %v1143
  // Predicated region
  $region14: #{tpu_custom_call.1} parent=0 // pred_check
    _
  $region15: #{tpu_custom_call.1} parent=0 // pred_check_branch
    %1210 = sbr.rel (0) target = $region17
  $region16: #{tpu_custom_call.1} parent=0 // pred_region
    _
  $region17: #{tpu_custom_call.1} parent=0 // pred_fallthru
    _
  // Predicated region
  $region18: #{tpu_custom_call.1} parent=0 // pred_check
    _
  $region19: #{tpu_custom_call.1} parent=0 // pred_check_branch
    %1212 = sbr.rel (0) target = $region21
  $region20: #{tpu_custom_call.1} parent=0 // pred_region
    _
  $region21: #{tpu_custom_call.1} parent=0 // pred_fallthru
    _

</llo_original>
